<compile_context>
chip_gen: v5e
topology: v5e:2x2
jax: 0.10.0
libtpu: 0.0.40
codegen_flags: <defaults>
</compile_context>

<pallas_src>
from typing import NamedTuple

import jax
import jax.numpy as jnp
from jax.experimental import pallas as pl
from jax.experimental.pallas import tpu as pltpu


def _round_up(n: int, m: int) -> int:
    return ((n + m - 1) // m) * m


def _pad_dim(n: int) -> int:
    # Lane-dense padding: at least 128; once past 128 align to 256 so the
    # 256x256 MXUs on v6e/v7x run full-width result columns.
    return 128 if n <= 128 else _round_up(n, 256)


def _two_layer_kernel(x_ref, w1_ref, b1_ref, w2_ref, b2_ref, o_ref):
    # x stays f32 in HBM; cast to the MXU compute dtype in-kernel (VPU work,
    # hidden under the matmuls) instead of paying an extra HBM round trip.
    x = x_ref[...].astype(w1_ref.dtype)                       # [tile_b, d_in]
    # h = x @ w1t : canonical [M,K]x[K,N] contraction — weights were
    # pre-transposed once at init, so no in-kernel transpose / relayout.
    h = jnp.dot(x, w1_ref[...], preferred_element_type=jnp.float32)
    h = jnp.maximum(h + b1_ref[...], 0.0)                     # bias + ReLU, f32
    y = jnp.dot(h.astype(w2_ref.dtype), w2_ref[...],
                preferred_element_type=jnp.float32)
    o_ref[...] = (y + b2_ref[...]).astype(o_ref.dtype)


class TwoLayerParams(NamedTuple):
    w1t: jax.Array   # [d_in, hidden_p]     compute dtype, pre-padded + pre-transposed
    b1: jax.Array    # [1, hidden_p]        f32
    w2t: jax.Array   # [hidden_p, d_out_p]  compute dtype
    b2: jax.Array    # [1, d_out_p]         f32
    d_out: int       # true (unpadded) output width


def prepare_two_layer_params(w1, b1, w2, b2, *, compute_dtype=jnp.bfloat16):
    """One-time weight preparation (call at init, NOT per forward).

    w1: [hidden, d_in]  b1: [hidden]   (PyTorch nn.Linear layout)
    w2: [d_out, hidden] b2: [d_out]
    compute_dtype: MXU operand dtype (bf16 default; pass jnp.float32 for the
                   exact path).  Accumulation / bias / ReLU stay f32.
    """
    hidden, d_in = w1.shape
    d_out, hidden_w = w2.shape
    assert hidden == hidden_w and b1.shape == (hidden,) and b2.shape == (d_out,)
    hidden_p, d_out_p = _pad_dim(hidden), _pad_dim(d_out)
    # Pad + transpose to [K, N] so the kernel contracts x dim 1 with weight
    # dim 0 (canonical form, no Mosaic relayout of the loop-invariant tiles).
    w1t = jnp.pad(w1, ((0, hidden_p - hidden), (0, 0))).T.astype(compute_dtype)
    w2t = jnp.pad(w2, ((0, d_out_p - d_out), (0, hidden_p - hidden))).T.astype(compute_dtype)
    b1p = jnp.pad(b1, (0, hidden_p - hidden)).reshape(1, hidden_p).astype(jnp.float32)
    b2p = jnp.pad(b2, (0, d_out_p - d_out)).reshape(1, d_out_p).astype(jnp.float32)
    jax.block_until_ready((w1t, b1p, w2t, b2p))   # materialize once, here
    return TwoLayerParams(w1t, b1p, w2t, b2p, d_out)


def _pick_tile_b(B, d_in, hidden_p, d_out_p, weight_bytes, x_isz, o_isz):
    # VMEM budget conservative across generations (v5e 16 MiB / v6e 32 MiB /
    # v7x 32 MiB default scoped — we raise the limit explicitly below).
    budget = 24 << 20
    per_row = (2 * d_in * x_isz            # x tile, double-buffered
               + 2 * d_out_p * o_isz       # out tile, double-buffered
               + hidden_p * 6              # f32 h + compute-dtype h copy
               + d_out_p * 4)              # f32 y before output cast
    avail = max(budget - weight_bytes, 16 * per_row)
    tile = int(avail // per_row)
    tile = max(16, min(tile, 2048))
    tile -= tile % 16                       # multiple of 16: bf16 sublane packing
    b16 = _round_up(B, 16)
    if tile >= b16:
        tile = b16
        if b16 >= 512:
            # Large single-step grids leave one v7x TensorCore idle; split.
            tile = _round_up((b16 + 1) // 2, 16)
    return tile


def _vmem_limit_bytes(weight_bytes, weight_buffers, tile_b, d_in, hidden_p,
                      d_out_p, x_isz, o_isz):
    pipeline = 2 * tile_b * (d_in * x_isz + d_out_p * o_isz)   # x/out double-buffered
    temps = tile_b * (hidden_p * 6 + d_out_p * 4)              # in-kernel f32/bf16 temps
    need = weight_buffers * weight_bytes + pipeline + temps
    limit = int(need * 1.25) + (2 << 20)                       # ~25% headroom + slack
    # Floor keeps compiler scratch happy; cap stays under v7x's 64 MiB physical.
    return max(32 << 20, min(limit, 48 << 20))


def two_layer_net(x, params: TwoLayerParams, *, tile_b=None):
    """Forward pass: x [B, d_in] -> [B, d_out] == linear2(relu(linear1(x)))."""
    w1t, b1p, w2t, b2p, d_out = params
    B, d_in = x.shape
    d_in_w, hidden_p = w1t.shape
    hidden_w, d_out_p = w2t.shape
    assert d_in == d_in_w and hidden_p == hidden_w

    out_dtype = x.dtype
    x_isz = jnp.dtype(x.dtype).itemsize
    o_isz = jnp.dtype(out_dtype).itemsize
    w_isz = jnp.dtype(w1t.dtype).itemsize
    weight_bytes = (w1t.size + w2t.size) * w_isz + (b1p.size + b2p.size) * 4

    if tile_b is None:
        tile_b = _pick_tile_b(B, d_in, hidden_p, d_out_p, weight_bytes, x_isz, o_isz)
    else:
        tile_b = _round_up(tile_b, 16)

    B_p = _round_up(B, tile_b)
    x_p = x if B_p == B else jnp.pad(x, ((0, B_p - B), (0, 0)))
    # NOTE: d_in (K) is deliberately left unpadded — padding K would multiply
    # x HBM traffic for zero extra useful MXU work.

    flops = 2 * B_p * (d_in * hidden_p + hidden_p * d_out_p)
    bytes_accessed = int(B_p * d_in * x_isz + weight_bytes + B_p * d_out_p * o_isz)

    def run(single_buffer_weights):
        # Loop-invariant weights/biases: one VMEM buffer is enough.
        wmode = dict(pipeline_mode=pl.Buffered(1)) if single_buffer_weights else {}
        vmem_limit = _vmem_limit_bytes(weight_bytes,
                                       1 if single_buffer_weights else 2,
                                       tile_b, d_in, hidden_p, d_out_p, x_isz, o_isz)
        return pl.pallas_call(
            _two_layer_kernel,
            out_shape=jax.ShapeDtypeStruct((B_p, d_out_p), out_dtype),
            grid=(B_p // tile_b,),
            in_specs=[
                pl.BlockSpec((tile_b, d_in), lambda i: (i, 0)),              # x: batch-tiled
                pl.BlockSpec((d_in, hidden_p), lambda i: (0, 0), **wmode),   # w1t resident
                pl.BlockSpec((1, hidden_p), lambda i: (0, 0), **wmode),      # b1 resident
                pl.BlockSpec((hidden_p, d_out_p), lambda i: (0, 0), **wmode),# w2t resident
                pl.BlockSpec((1, d_out_p), lambda i: (0, 0), **wmode),       # b2 resident
            ],
            out_specs=pl.BlockSpec((tile_b, d_out_p), lambda i: (i, 0)),
            compiler_params=pltpu.CompilerParams(
                dimension_semantics=("parallel",),     # shard batch steps across TCs (v7x)
                vmem_limit_bytes=vmem_limit),
            cost_estimate=pl.CostEstimate(
                flops=flops, transcendentals=0, bytes_accessed=bytes_accessed),
        )(x_p, w1t, b1p, w2t, b2p)

    try:
        out = run(True)
    except Exception:
        # Fallback if this jax build rejects pipeline_mode=pl.Buffered(1):
        # identical kernel with default (double-buffered) weight specs.
        out = run(False)

    # Slice away batch / lane padding.
    return out[:B, :d_out]


def _reference(x, w1, b1, w2, b2):
    h = jnp.maximum(x @ w1.T + b1, 0.0)
    return h @ w2.T + b2


if __name__ == "__main__":
    # Small shapes implied by the module: depth_in=32, hidden_layer=64, depth_out=16
    B, depth_in, hidden_layer, depth_out = 8, 32, 64, 16

    key = jax.random.PRNGKey(0)
    k_x, k_w1, k_b1, k_w2, k_b2 = jax.random.split(key, 5)

    x = jax.random.normal(k_x, (B, depth_in), dtype=jnp.float32)
    bound1 = 1.0 / (depth_in ** 0.5)
    bound2 = 1.0 / (hidden_layer ** 0.5)
    w1 = jax.random.uniform(k_w1, (hidden_layer, depth_in), jnp.float32, -bound1, bound1)
    b1 = jax.random.uniform(k_b1, (hidden_layer,), jnp.float32, -bound1, bound1)
    w2 = jax.random.uniform(k_w2, (depth_out, hidden_layer), jnp.float32, -bound2, bound2)
    b2 = jax.random.uniform(k_b2, (depth_out,), jnp.float32, -bound2, bound2)

    y_ref = _reference(x, w1, b1, w2, b2)

    # Exact path (f32 MXU operands): matches the PyTorch forward semantics.
    params_f32 = prepare_two_layer_params(w1, b1, w2, b2, compute_dtype=jnp.float32)
    y32 = two_layer_net(x, params_f32)
    jax.block_until_ready(y32)
    assert y32.shape == (B, depth_out)
    assert jnp.allclose(y32, y_ref, atol=1e-5, rtol=1e-5)

    # Default fast path: bf16 MXU operands (cast in-kernel), f32 accumulation.
    params_bf16 = prepare_two_layer_params(w1, b1, w2, b2)
    y16 = two_layer_net(x, params_bf16)
    jax.block_until_ready(y16)
    assert y16.shape == (B, depth_out)
    assert jnp.allclose(y16, y_ref, atol=5e-2, rtol=5e-2)

    print("KERNEL_OK")
</pallas_src>

<mosaic_0001>
module attributes {stable_mosaic.version = 11 : i64} {
  func.func @_two_layer_kernel(%arg0: i32, %arg1: memref<16x32xf32, #tpu.memory_space<vmem>>, %arg2: memref<32x128xf32, #tpu.memory_space<vmem>>, %arg3: memref<1x128xf32, #tpu.memory_space<vmem>>, %arg4: memref<128x128xf32, #tpu.memory_space<vmem>>, %arg5: memref<1x128xf32, #tpu.memory_space<vmem>>, %arg6: memref<16x128xf32, #tpu.memory_space<vmem>>) attributes {dimension_semantics = [#tpu.dimension_semantics<parallel>], iteration_bounds = array<i64: 1>, scalar_prefetch = 0 : i64, scratch_operands = 0 : i64, tpu.core_type = #tpu.core_type<tc>, window_params = [{transform_indices = @transform_0, window_bounds = array<i64: 16, 32>}, {pipeline_mode = #tpu.pipeline_mode<synchronous>, transform_indices = @transform_1, window_bounds = array<i64: 32, 128>}, {pipeline_mode = #tpu.pipeline_mode<synchronous>, transform_indices = @transform_2, window_bounds = array<i64: 1, 128>}, {pipeline_mode = #tpu.pipeline_mode<synchronous>, transform_indices = @transform_3, window_bounds = array<i64: 128, 128>}, {pipeline_mode = #tpu.pipeline_mode<synchronous>, transform_indices = @transform_4, window_bounds = array<i64: 1, 128>}, {transform_indices = @transform_5, window_bounds = array<i64: 16, 128>}]} {
    %c0 = arith.constant 0 : index
    %c0_0 = arith.constant 0 : index
    %0 = vector.load %arg1[%c0, %c0_0] : memref<16x32xf32, #tpu.memory_space<vmem>>, vector<16x32xf32>
    %c0_1 = arith.constant 0 : index
    %c0_2 = arith.constant 0 : index
    %1 = vector.load %arg2[%c0_1, %c0_2] : memref<32x128xf32, #tpu.memory_space<vmem>>, vector<32x128xf32>
    %cst = arith.constant dense<0.000000e+00> : vector<16x128xf32>
    %2 = tpu.matmul %0, %1, %cst {dimension_numbers = #tpu.dot_dimension_numbers<[1], [0], [0], [1], [0, 0, 1, 1], [], []>} : vector<16x32xf32>, vector<32x128xf32>, vector<16x128xf32> -> vector<16x128xf32>
    %c0_3 = arith.constant 0 : index
    %c0_4 = arith.constant 0 : index
    %3 = vector.load %arg3[%c0_3, %c0_4] : memref<1x128xf32, #tpu.memory_space<vmem>>, vector<1x128xf32>
    %4 = vector.broadcast %3 : vector<1x128xf32> to vector<16x128xf32>
    %5 = arith.addf %2, %4 : vector<16x128xf32>
    %cst_5 = arith.constant 0.000000e+00 : f32
    %6 = vector.broadcast %cst_5 : f32 to vector<16x128xf32>
    %7 = arith.maximumf %5, %6 : vector<16x128xf32>
    %c0_6 = arith.constant 0 : index
    %c0_7 = arith.constant 0 : index
    %8 = vector.load %arg4[%c0_6, %c0_7] : memref<128x128xf32, #tpu.memory_space<vmem>>, vector<128x128xf32>
    %cst_8 = arith.constant dense<0.000000e+00> : vector<16x128xf32>
    %9 = tpu.matmul %7, %8, %cst_8 {dimension_numbers = #tpu.dot_dimension_numbers<[1], [0], [0], [1], [0, 0, 1, 1], [], []>} : vector<16x128xf32>, vector<128x128xf32>, vector<16x128xf32> -> vector<16x128xf32>
    %c0_9 = arith.constant 0 : index
    %c0_10 = arith.constant 0 : index
    %10 = vector.load %arg5[%c0_9, %c0_10] : memref<1x128xf32, #tpu.memory_space<vmem>>, vector<1x128xf32>
    %11 = vector.broadcast %10 : vector<1x128xf32> to vector<16x128xf32>
    %12 = arith.addf %9, %11 : vector<16x128xf32>
    %c0_11 = arith.constant 0 : index
    %c0_12 = arith.constant 0 : index
    %13 = vector.load %arg6[%c0_11, %c0_12] : memref<16x128xf32, #tpu.memory_space<vmem>>, vector<16x128xf32>
    tpu.vector_store %arg6[%c0_11, %c0_12], %12 {strides = array<i32>} : memref<16x128xf32, #tpu.memory_space<vmem>>, vector<16x128xf32>,
    return
  }
  func.func @transform_0(%arg0: i32) -> (i32, i32) {
    %c0_i32 = arith.constant 0 : i32
    %c0_i32_0 = arith.constant 0 : i32
    return %arg0, %c0_i32 : i32, i32
  }
  func.func @transform_1(%arg0: i32) -> (i32, i32) {
    %c0_i32 = arith.constant 0 : i32
    %c0_i32_0 = arith.constant 0 : i32
    %c0_i32_1 = arith.constant 0 : i32
    return %c0_i32, %c0_i32_0 : i32, i32
  }
  func.func @transform_2(%arg0: i32) -> (i32, i32) {
    %c0_i32 = arith.constant 0 : i32
    %c0_i32_0 = arith.constant 0 : i32
    %c0_i32_1 = arith.constant 0 : i32
    return %c0_i32, %c0_i32_0 : i32, i32
  }
  func.func @transform_3(%arg0: i32) -> (i32, i32) {
    %c0_i32 = arith.constant 0 : i32
    %c0_i32_0 = arith.constant 0 : i32
    %c0_i32_1 = arith.constant 0 : i32
    return %c0_i32, %c0_i32_0 : i32, i32
  }
  func.func @transform_4(%arg0: i32) -> (i32, i32) {
    %c0_i32 = arith.constant 0 : i32
    %c0_i32_0 = arith.constant 0 : i32
    %c0_i32_1 = arith.constant 0 : i32
    return %c0_i32, %c0_i32_0 : i32, i32
  }
  func.func @transform_5(%arg0: i32) -> (i32, i32) {
    %c0_i32 = arith.constant 0 : i32
    %c0_i32_0 = arith.constant 0 : i32
    return %arg0, %c0_i32 : i32, i32
  }
}

module attributes {stable_mosaic.version = 11 : i64} {
  func.func @_two_layer_kernel(%arg0: i32, %arg1: memref<16x32xf32, #tpu.memory_space<vmem>>, %arg2: memref<32x128xf32, #tpu.memory_space<vmem>>, %arg3: memref<1x128xf32, #tpu.memory_space<vmem>>, %arg4: memref<128x128xf32, #tpu.memory_space<vmem>>, %arg5: memref<1x128xf32, #tpu.memory_space<vmem>>, %arg6: memref<16x128xf32, #tpu.memory_space<vmem>>) attributes {dimension_semantics = [#tpu.dimension_semantics<parallel>], iteration_bounds = array<i64: 1>, scalar_prefetch = 0 : i64, scratch_operands = 0 : i64, tpu.core_type = #tpu.core_type<tc>, window_params = [{transform_indices = @transform_0, window_bounds = array<i64: 16, 32>}, {pipeline_mode = #tpu.pipeline_mode<synchronous>, transform_indices = @transform_1, window_bounds = array<i64: 32, 128>}, {pipeline_mode = #tpu.pipeline_mode<synchronous>, transform_indices = @transform_2, window_bounds = array<i64: 1, 128>}, {pipeline_mode = #tpu.pipeline_mode<synchronous>, transform_indices = @transform_3, window_bounds = array<i64: 128, 128>}, {pipeline_mode = #tpu.pipeline_mode<synchronous>, transform_indices = @transform_4, window_bounds = array<i64: 1, 128>}, {transform_indices = @transform_5, window_bounds = array<i64: 16, 128>}]} {
    %c0 = arith.constant 0 : index
    %c0_0 = arith.constant 0 : index
    %0 = vector.load %arg1[%c0, %c0_0] : memref<16x32xf32, #tpu.memory_space<vmem>>, vector<16x32xf32>
    %c0_1 = arith.constant 0 : index
    %c0_2 = arith.constant 0 : index
    %1 = vector.load %arg2[%c0_1, %c0_2] : memref<32x128xf32, #tpu.memory_space<vmem>>, vector<32x128xf32>
    %cst = arith.constant dense<0.000000e+00> : vector<16x128xf32>
    %2 = tpu.matmul %0, %1, %cst {dimension_numbers = #tpu.dot_dimension_numbers<[1], [0], [0], [1], [0, 0, 1, 1], [], []>} : vector<16x32xf32>, vector<32x128xf32>, vector<16x128xf32> -> vector<16x128xf32>
    %c0_3 = arith.constant 0 : index
    %c0_4 = arith.constant 0 : index
    %3 = vector.load %arg3[%c0_3, %c0_4] : memref<1x128xf32, #tpu.memory_space<vmem>>, vector<1x128xf32>
    %4 = vector.broadcast %3 : vector<1x128xf32> to vector<16x128xf32>
    %5 = arith.addf %2, %4 : vector<16x128xf32>
    %cst_5 = arith.constant 0.000000e+00 : f32
    %6 = vector.broadcast %cst_5 : f32 to vector<16x128xf32>
    %7 = arith.maximumf %5, %6 : vector<16x128xf32>
    %c0_6 = arith.constant 0 : index
    %c0_7 = arith.constant 0 : index
    %8 = vector.load %arg4[%c0_6, %c0_7] : memref<128x128xf32, #tpu.memory_space<vmem>>, vector<128x128xf32>
    %cst_8 = arith.constant dense<0.000000e+00> : vector<16x128xf32>
    %9 = tpu.matmul %7, %8, %cst_8 {dimension_numbers = #tpu.dot_dimension_numbers<[1], [0], [0], [1], [0, 0, 1, 1], [], []>} : vector<16x128xf32>, vector<128x128xf32>, vector<16x128xf32> -> vector<16x128xf32>
    %c0_9 = arith.constant 0 : index
    %c0_10 = arith.constant 0 : index
    %10 = vector.load %arg5[%c0_9, %c0_10] : memref<1x128xf32, #tpu.memory_space<vmem>>, vector<1x128xf32>
    %11 = vector.broadcast %10 : vector<1x128xf32> to vector<16x128xf32>
    %12 = arith.addf %9, %11 : vector<16x128xf32>
    %c0_11 = arith.constant 0 : index
    %c0_12 = arith.constant 0 : index
    %13 = vector.load %arg6[%c0_11, %c0_12] : memref<16x128xf32, #tpu.memory_space<vmem>>, vector<16x128xf32>
    tpu.vector_store %arg6[%c0_11, %c0_12], %12 {strides = array<i32>} : memref<16x128xf32, #tpu.memory_space<vmem>>, vector<16x128xf32>,
    return
  }
  func.func @transform_0(%arg0: i32) -> (i32, i32) {
    %c0_i32 = arith.constant 0 : i32
    %c0_i32_0 = arith.constant 0 : i32
    return %arg0, %c0_i32 : i32, i32
  }
  func.func @transform_1(%arg0: i32) -> (i32, i32) {
    %c0_i32 = arith.constant 0 : i32
    %c0_i32_0 = arith.constant 0 : i32
    %c0_i32_1 = arith.constant 0 : i32
    return %c0_i32, %c0_i32_0 : i32, i32
  }
  func.func @transform_2(%arg0: i32) -> (i32, i32) {
    %c0_i32 = arith.constant 0 : i32
    %c0_i32_0 = arith.constant 0 : i32
    %c0_i32_1 = arith.constant 0 : i32
    return %c0_i32, %c0_i32_0 : i32, i32
  }
  func.func @transform_3(%arg0: i32) -> (i32, i32) {
    %c0_i32 = arith.constant 0 : i32
    %c0_i32_0 = arith.constant 0 : i32
    %c0_i32_1 = arith.constant 0 : i32
    return %c0_i32, %c0_i32_0 : i32, i32
  }
  func.func @transform_4(%arg0: i32) -> (i32, i32) {
    %c0_i32 = arith.constant 0 : i32
    %c0_i32_0 = arith.constant 0 : i32
    %c0_i32_1 = arith.constant 0 : i32
    return %c0_i32, %c0_i32_0 : i32, i32
  }
  func.func @transform_5(%arg0: i32) -> (i32, i32) {
    %c0_i32 = arith.constant 0 : i32
    %c0_i32_0 = arith.constant 0 : i32
    return %arg0, %c0_i32 : i32, i32
  }
}

</mosaic_0001>

<llo_original>
// kernel: tpu_custom_call.1
$region0: #{tpu_custom_call.1}
  #allocation0 [shape = 'u32[]', space=smem, size = 0x4, offset = 0x4, fixed_abs, tag = 'smem constant byte address 0x4 - core index']
  #allocation1 [shape = 'u32[72,128]{1,0:T(1,128)}', space=vmem, size = 0x9000, scoped, tag = 'internal scratch']
  %s0 = inlined_call_operand.hbm [shape: f32[16,32], index: 0, kind: input, shape index: {}]
  %s1 = inlined_call_operand.hbm [shape: f32[32,128], index: 1, kind: input, shape index: {}]
  %s2 = inlined_call_operand.vmem [shape: f32[1,128], index: 2, kind: input, shape index: {}]
  %s3 = inlined_call_operand.hbm [shape: f32[128,128], index: 3, kind: input, shape index: {}]
  %s4 = inlined_call_operand.vmem [shape: f32[1,128], index: 4, kind: input, shape index: {}]
  %s5 = inlined_call_operand.hbm [shape: f32[16,128], index: 5, kind: output, shape index: {}]
  %s6 = sld [smem:[#allocation0]]
  $region42: #{tpu_custom_call.1} parent=0
    _
  %s8 = ssub.s32 1, %s6
  %s9 = scalar_select 0, %s8, %s6
  $region1: #{tpu_custom_call.1} parent=0
    #allocation2 [shape = 'u8[8192]{0}', space=vmem, size = 0x2000, scoped, tag = 'input window, operand 0, single buffered']
    #allocation3 [shape = 's32[1]{0}', space=sflag, size = 0x4, scoped, tag = 'scoped memory for tpu_custom_call.1']
    #allocation4 [shape = 's32[1]{0}', space=sflag, size = 0x4, scoped, tag = 'scoped memory for tpu_custom_call.1']
    #allocation5 [shape = 'u8[16384]{0}', space=vmem, size = 0x4000, scoped, tag = 'input window, operand 1, single buffered']
    #allocation6 [shape = 's32[1]{0}', space=sflag, size = 0x4, scoped, tag = 'scoped memory for tpu_custom_call.1']
    #allocation7 [shape = 'u8[65536]{0}', space=vmem, size = 0x10000, scoped, tag = 'input window, operand 3, single buffered']
    #allocation8 [shape = 'u8[8192]{0}', space=vmem, size = 0x2000, scoped, tag = 'output window, operand 0, single buffered']
    %10 = vsyncpa [#allocation3], 0
    %11 = vsyncpa [#allocation6], 0
    %12 = vsyncpa [#allocation4], 0
    // Predicated region
    $region2: #{tpu_custom_call.1} parent=1 // pred_check
      _
    $region3: #{tpu_custom_call.1} parent=1 // pred_check_branch
      %14 = sbr.rel (0) target = $region5
    $region4: #{tpu_custom_call.1} parent=1 // pred_region
      %16 = vsyncadd [#allocation3], 0
      %s17 = sshll.u32 %s0, 4
      %s18 = int_to_ptr.hbm [resolvable:$true] %s17
      %s19 = sshll.u32 [#allocation2], 4
      %s20 = int_to_ptr.vmem [resolvable:$true] %s19
      %25 = dma.hbm_to_vmem [thread:$0]  %s18, 256, %s20, [#allocation3], 128, 128, 8
    $region5: #{tpu_custom_call.1} parent=1 // pred_fallthru
      _
    // Predicated region
    $region6: #{tpu_custom_call.1} parent=1 // pred_check
      _
    $region7: #{tpu_custom_call.1} parent=1 // pred_check_branch
      %27 = sbr.rel (0) target = $region9
    $region8: #{tpu_custom_call.1} parent=1 // pred_region
      %29 = vsyncadd [#allocation6], 0
      %s30 = sshll.u32 %s1, 4
      %s31 = int_to_ptr.hbm [resolvable:$true] %s30
      %s32 = sshll.u32 [#allocation5], 4
      %s33 = int_to_ptr.vmem [resolvable:$true] %s32
      %38 = dma.hbm_to_vmem [thread:$0]  %s31, 512, %s33, [#allocation6], 128, 128, 8
    $region9: #{tpu_custom_call.1} parent=1 // pred_fallthru
      _
    // Predicated region
    $region10: #{tpu_custom_call.1} parent=1 // pred_check
      _
    $region11: #{tpu_custom_call.1} parent=1 // pred_check_branch
      %40 = sbr.rel (0) target = $region13
    $region12: #{tpu_custom_call.1} parent=1 // pred_region
      _
    $region13: #{tpu_custom_call.1} parent=1 // pred_fallthru
      _
    // Predicated region
    $region14: #{tpu_custom_call.1} parent=1 // pred_check
      _
    $region15: #{tpu_custom_call.1} parent=1 // pred_check_branch
      %42 = sbr.rel (0) target = $region17
    $region16: #{tpu_custom_call.1} parent=1 // pred_region
      %44 = vsyncadd [#allocation6], 0
      %s45 = sshll.u32 %s3, 4
      %s46 = int_to_ptr.hbm [resolvable:$true] %s45
      %s47 = sshll.u32 [#allocation7], 4
      %s48 = int_to_ptr.vmem [resolvable:$true] %s47
      %53 = dma.hbm_to_vmem [thread:$0]  %s46, 2048, %s48, [#allocation6], 128, 128, 8
    $region17: #{tpu_custom_call.1} parent=1 // pred_fallthru
      _
    // Predicated region
    $region18: #{tpu_custom_call.1} parent=1 // pred_check
      _
    $region19: #{tpu_custom_call.1} parent=1 // pred_check_branch
      %55 = sbr.rel (0) target = $region21
    $region20: #{tpu_custom_call.1} parent=1 // pred_region
      _
    $region21: #{tpu_custom_call.1} parent=1 // pred_fallthru
      _
    // Predicated region
    $region22: #{tpu_custom_call.1} parent=1 // pred_check
      _
    $region23: #{tpu_custom_call.1} parent=1 // pred_check_branch
      %57 = sbr.rel (0) target = $region25
    $region24: #{tpu_custom_call.1} parent=1 // pred_region
      %59 = dma.done [#allocation3], 256
    $region25: #{tpu_custom_call.1} parent=1 // pred_fallthru
      _
    // Predicated region
    $region26: #{tpu_custom_call.1} parent=1 // pred_check
      _
    $region27: #{tpu_custom_call.1} parent=1 // pred_check_branch
      %61 = sbr.rel (0) target = $region29
    $region28: #{tpu_custom_call.1} parent=1 // pred_region
      %63 = dma.done [#allocation6], 512
    $region29: #{tpu_custom_call.1} parent=1 // pred_fallthru
      _
    // Predicated region
    $region30: #{tpu_custom_call.1} parent=1 // pred_check
      _
    $region31: #{tpu_custom_call.1} parent=1 // pred_check_branch
      %65 = sbr.rel (0) target = $region33
    $region32: #{tpu_custom_call.1} parent=1 // pred_region
      %67 = dma.done [#allocation6], 2048
    $region33: #{tpu_custom_call.1} parent=1 // pred_fallthru
      _
    %v68 = vld [vmem:[#allocation2] sm:$0xff]
    %v69 = vld [vmem:[#allocation2 + $0x8] sm:$0xff]
    %v70 = vld [vmem:[#allocation5] sm:$0xff]
    %v71 = vld [vmem:[#allocation5 + $0x8] sm:$0xff]
    %v72 = vld [vmem:[#allocation5 + $0x10] sm:$0xff]
    %v73 = vld [vmem:[#allocation5 + $0x18] sm:$0xff]
    %v74 = vld [vmem:[%s2] sm:$0x1]
    %v76 = vperm.slane %v74, 0
    %vm78 = vcmask 261120
    %v80 = vsel %vm78, %v68, 0
    %v83 = vsel %vm78, %v69, 0
    %85 = vmatpush.msra.mxu0 0.0
    %86 = vmatpush.msra.mxu0 0.0
    %87 = vmatpush.msra.mxu0 0.0
    %88 = vmatpush.msra.mxu0 0.0
    %89 = vmatpush.msra.mxu0 0.0
    %90 = vmatpush.msra.mxu0 0.0
    %91 = vmatpush.msra.mxu0 0.0
    %92 = vmatpush.msra.mxu0 0.0
    %93 = vmatpush.msra.mxu0 0.0
    %94 = vmatpush.msra.mxu0 0.0
    %95 = vmatpush.msra.mxu0 0.0
    %96 = vmatpush.msra.mxu0 0.0
    %97 = vmatpush.msra.mxu0 %v73
    %98 = vmatpush.msra.mxu0 %v72
    %99 = vmatpush.msra.mxu0 %v71
    %100 = vmatpush.msra.mxu0 %v70
    %101 = vmatmul.f32.gmra.mxu0 %v80
    %v102 = vpop.f32.mrf.mxu0
    %v103 = vadd.f32 %v76, %v102
    %104 = vmatmul.f32.gmra.mxu0 %v83
    %v105 = vpop.f32.mrf.mxu0
    %v106 = vadd.f32 %v76, %v105
    %107 = vdwg.mxu0
    %v108 = vmax.f32 %v103, 0.0
    %v109 = vmax.f32 %v106, 0.0
    %v110 = vld [vmem:[#allocation7] sm:$0xff]
    %v111 = vld [vmem:[#allocation7 + $0x8] sm:$0xff]
    %v112 = vld [vmem:[#allocation7 + $0x10] sm:$0xff]
    %v113 = vld [vmem:[#allocation7 + $0x18] sm:$0xff]
    %v114 = vld [vmem:[#allocation7 + $0x20] sm:$0xff]
    %v115 = vld [vmem:[#allocation7 + $0x28] sm:$0xff]
    %v116 = vld [vmem:[#allocation7 + $0x30] sm:$0xff]
    %v117 = vld [vmem:[#allocation7 + $0x38] sm:$0xff]
    %v118 = vld [vmem:[#allocation7 + $0x40] sm:$0xff]
    %v119 = vld [vmem:[#allocation7 + $0x48] sm:$0xff]
    %v120 = vld [vmem:[#allocation7 + $0x50] sm:$0xff]
    %v121 = vld [vmem:[#allocation7 + $0x58] sm:$0xff]
    %v122 = vld [vmem:[#allocation7 + $0x60] sm:$0xff]
    %v123 = vld [vmem:[#allocation7 + $0x68] sm:$0xff]
    %v124 = vld [vmem:[#allocation7 + $0x70] sm:$0xff]
    %v125 = vld [vmem:[#allocation7 + $0x78] sm:$0xff]
    %v126 = vld [vmem:[%s4] sm:$0x1]
    %v128 = vperm.slane %v126, 0
    %130 = vmatpush.msra.mxu0 %v125
    %131 = vmatpush.msra.mxu0 %v124
    %132 = vmatpush.msra.mxu0 %v123
    %133 = vmatpush.msra.mxu0 %v122
    %134 = vmatpush.msra.mxu0 %v121
    %135 = vmatpush.msra.mxu0 %v120
    %136 = vmatpush.msra.mxu0 %v119
    %137 = vmatpush.msra.mxu0 %v118
    %138 = vmatpush.msra.mxu0 %v117
    %139 = vmatpush.msra.mxu0 %v116
    %140 = vmatpush.msra.mxu0 %v115
    %141 = vmatpush.msra.mxu0 %v114
    %142 = vmatpush.msra.mxu0 %v113
    %143 = vmatpush.msra.mxu0 %v112
    %144 = vmatpush.msra.mxu0 %v111
    %145 = vmatpush.msra.mxu0 %v110
    %146 = vmatmul.f32.gmra.mxu0 %v108
    %v147 = vpop.f32.mrf.mxu0
    %v148 = vadd.f32 %v128, %v147
    %149 = vmatmul.f32.gmra.mxu0 %v109
    %v150 = vpop.f32.mrf.mxu0
    %v151 = vadd.f32 %v128, %v150
    %152 = vdwg.mxu0
    %153 = vst [vmem:[#allocation8] sm:$0xff] %v148
    %154 = vst [vmem:[#allocation8 + $0x8] sm:$0xff] %v151
    // Predicated region
    $region34: #{tpu_custom_call.1} parent=1 // pred_check
      _
    $region35: #{tpu_custom_call.1} parent=1 // pred_check_branch
      %156 = sbr.rel (0) target = $region37
    $region36: #{tpu_custom_call.1} parent=1 // pred_region
      %158 = vsyncadd [#allocation4], 0
      %s159 = sshll.u32 [#allocation8], 4
      %s160 = int_to_ptr.vmem [resolvable:$true] %s159
      %s161 = sshll.u32 %s5, 4
      %s162 = int_to_ptr.hbm [resolvable:$true] %s161
      %167 = dma.vmem_to_hbm [thread:$0]  %s160, 256, %s162, [#allocation4], 128, 128, 8
    $region37: #{tpu_custom_call.1} parent=1 // pred_fallthru
      _
    // Predicated region
    $region38: #{tpu_custom_call.1} parent=1 // pred_check
      _
    $region39: #{tpu_custom_call.1} parent=1 // pred_check_branch
      %169 = sbr.rel (0) target = $region41
    $region40: #{tpu_custom_call.1} parent=1 // pred_region
      %171 = dma.done [#allocation4], 256
    $region41: #{tpu_custom_call.1} parent=1 // pred_fallthru
      _
    %172 = vsyncpa [#allocation3], 1
    %173 = vsyncpa [#allocation6], 1
    %174 = vsyncpa [#allocation4], 1

// kernel: tpu_custom_call.1
$region0: #{tpu_custom_call.1}
  #allocation0 [shape = 'u32[]', space=smem, size = 0x4, offset = 0x4, fixed_abs, tag = 'smem constant byte address 0x4 - core index']
  #allocation1 [shape = 'u32[72,128]{1,0:T(1,128)}', space=vmem, size = 0x9000, scoped, tag = 'internal scratch']
  %s0 = inlined_call_operand.hbm [shape: f32[16,32], index: 0, kind: input, shape index: {}]
  %s1 = inlined_call_operand.hbm [shape: f32[32,128], index: 1, kind: input, shape index: {}]
  %s2 = inlined_call_operand.vmem [shape: f32[1,128], index: 2, kind: input, shape index: {}]
  %s3 = inlined_call_operand.hbm [shape: f32[128,128], index: 3, kind: input, shape index: {}]
  %s4 = inlined_call_operand.vmem [shape: f32[1,128], index: 4, kind: input, shape index: {}]
  %s5 = inlined_call_operand.hbm [shape: f32[16,128], index: 5, kind: output, shape index: {}]
  %s6 = sld [smem:[#allocation0]]
  $region42: #{tpu_custom_call.1} parent=0
    _
  %s8 = ssub.s32 1, %s6
  %s9 = scalar_select 0, %s8, %s6
  $region1: #{tpu_custom_call.1} parent=0
    #allocation2 [shape = 'u8[8192]{0}', space=vmem, size = 0x2000, scoped, tag = 'input window, operand 0, single buffered']
    #allocation3 [shape = 's32[1]{0}', space=sflag, size = 0x4, scoped, tag = 'scoped memory for tpu_custom_call.1']
    #allocation4 [shape = 's32[1]{0}', space=sflag, size = 0x4, scoped, tag = 'scoped memory for tpu_custom_call.1']
    #allocation5 [shape = 'u8[16384]{0}', space=vmem, size = 0x4000, scoped, tag = 'input window, operand 1, single buffered']
    #allocation6 [shape = 's32[1]{0}', space=sflag, size = 0x4, scoped, tag = 'scoped memory for tpu_custom_call.1']
    #allocation7 [shape = 'u8[65536]{0}', space=vmem, size = 0x10000, scoped, tag = 'input window, operand 3, single buffered']
    #allocation8 [shape = 'u8[8192]{0}', space=vmem, size = 0x2000, scoped, tag = 'output window, operand 0, single buffered']
    %10 = vsyncpa [#allocation3], 0
    %11 = vsyncpa [#allocation6], 0
    %12 = vsyncpa [#allocation4], 0
    // Predicated region
    $region2: #{tpu_custom_call.1} parent=1 // pred_check
      _
    $region3: #{tpu_custom_call.1} parent=1 // pred_check_branch
      %14 = sbr.rel (0) target = $region5
    $region4: #{tpu_custom_call.1} parent=1 // pred_region
      %16 = vsyncadd [#allocation3], 0
      %s17 = sshll.u32 %s0, 4
      %s18 = int_to_ptr.hbm [resolvable:$true] %s17
      %s19 = sshll.u32 [#allocation2], 4
      %s20 = int_to_ptr.vmem [resolvable:$true] %s19
      %25 = dma.hbm_to_vmem [thread:$0]  %s18, 256, %s20, [#allocation3], 128, 128, 8
    $region5: #{tpu_custom_call.1} parent=1 // pred_fallthru
      _
    // Predicated region
    $region6: #{tpu_custom_call.1} parent=1 // pred_check
      _
    $region7: #{tpu_custom_call.1} parent=1 // pred_check_branch
      %27 = sbr.rel (0) target = $region9
    $region8: #{tpu_custom_call.1} parent=1 // pred_region
      %29 = vsyncadd [#allocation6], 0
      %s30 = sshll.u32 %s1, 4
      %s31 = int_to_ptr.hbm [resolvable:$true] %s30
      %s32 = sshll.u32 [#allocation5], 4
      %s33 = int_to_ptr.vmem [resolvable:$true] %s32
      %38 = dma.hbm_to_vmem [thread:$0]  %s31, 512, %s33, [#allocation6], 128, 128, 8
    $region9: #{tpu_custom_call.1} parent=1 // pred_fallthru
      _
    // Predicated region
    $region10: #{tpu_custom_call.1} parent=1 // pred_check
      _
    $region11: #{tpu_custom_call.1} parent=1 // pred_check_branch
      %40 = sbr.rel (0) target = $region13
    $region12: #{tpu_custom_call.1} parent=1 // pred_region
      _
    $region13: #{tpu_custom_call.1} parent=1 // pred_fallthru
      _
    // Predicated region
    $region14: #{tpu_custom_call.1} parent=1 // pred_check
      _
    $region15: #{tpu_custom_call.1} parent=1 // pred_check_branch
      %42 = sbr.rel (0) target = $region17
    $region16: #{tpu_custom_call.1} parent=1 // pred_region
      %44 = vsyncadd [#allocation6], 0
      %s45 = sshll.u32 %s3, 4
      %s46 = int_to_ptr.hbm [resolvable:$true] %s45
      %s47 = sshll.u32 [#allocation7], 4
      %s48 = int_to_ptr.vmem [resolvable:$true] %s47
      %53 = dma.hbm_to_vmem [thread:$0]  %s46, 2048, %s48, [#allocation6], 128, 128, 8
    $region17: #{tpu_custom_call.1} parent=1 // pred_fallthru
      _
    // Predicated region
    $region18: #{tpu_custom_call.1} parent=1 // pred_check
      _
    $region19: #{tpu_custom_call.1} parent=1 // pred_check_branch
      %55 = sbr.rel (0) target = $region21
    $region20: #{tpu_custom_call.1} parent=1 // pred_region
      _
    $region21: #{tpu_custom_call.1} parent=1 // pred_fallthru
      _
    // Predicated region
    $region22: #{tpu_custom_call.1} parent=1 // pred_check
      _
    $region23: #{tpu_custom_call.1} parent=1 // pred_check_branch
      %57 = sbr.rel (0) target = $region25
    $region24: #{tpu_custom_call.1} parent=1 // pred_region
      %59 = dma.done [#allocation3], 256
    $region25: #{tpu_custom_call.1} parent=1 // pred_fallthru
      _
    // Predicated region
    $region26: #{tpu_custom_call.1} parent=1 // pred_check
      _
    $region27: #{tpu_custom_call.1} parent=1 // pred_check_branch
      %61 = sbr.rel (0) target = $region29
    $region28: #{tpu_custom_call.1} parent=1 // pred_region
      %63 = dma.done [#allocation6], 512
    $region29: #{tpu_custom_call.1} parent=1 // pred_fallthru
      _
    // Predicated region
    $region30: #{tpu_custom_call.1} parent=1 // pred_check
      _
    $region31: #{tpu_custom_call.1} parent=1 // pred_check_branch
      %65 = sbr.rel (0) target = $region33
    $region32: #{tpu_custom_call.1} parent=1 // pred_region
      %67 = dma.done [#allocation6], 2048
    $region33: #{tpu_custom_call.1} parent=1 // pred_fallthru
      _
    %v68 = vld [vmem:[#allocation2] sm:$0xff]
    %v69 = vld [vmem:[#allocation2 + $0x8] sm:$0xff]
    %v70 = vld [vmem:[#allocation5] sm:$0xff]
    %v71 = vld [vmem:[#allocation5 + $0x8] sm:$0xff]
    %v72 = vld [vmem:[#allocation5 + $0x10] sm:$0xff]
    %v73 = vld [vmem:[#allocation5 + $0x18] sm:$0xff]
    %v74 = vld [vmem:[%s2] sm:$0x1]
    %v76 = vperm.slane %v74, 0
    %vm78 = vcmask 261120
    %v80 = vsel %vm78, %v68, 0
    %v83 = vsel %vm78, %v69, 0
    %85 = vmatpush.msra.mxu0 0.0
    %86 = vmatpush.msra.mxu0 0.0
    %87 = vmatpush.msra.mxu0 0.0
    %88 = vmatpush.msra.mxu0 0.0
    %89 = vmatpush.msra.mxu0 0.0
    %90 = vmatpush.msra.mxu0 0.0
    %91 = vmatpush.msra.mxu0 0.0
    %92 = vmatpush.msra.mxu0 0.0
    %93 = vmatpush.msra.mxu0 0.0
    %94 = vmatpush.msra.mxu0 0.0
    %95 = vmatpush.msra.mxu0 0.0
    %96 = vmatpush.msra.mxu0 0.0
    %97 = vmatpush.msra.mxu0 %v73
    %98 = vmatpush.msra.mxu0 %v72
    %99 = vmatpush.msra.mxu0 %v71
    %100 = vmatpush.msra.mxu0 %v70
    %101 = vmatmul.f32.gmra.mxu0 %v80
    %v102 = vpop.f32.mrf.mxu0
    %v103 = vadd.f32 %v76, %v102
    %104 = vmatmul.f32.gmra.mxu0 %v83
    %v105 = vpop.f32.mrf.mxu0
    %v106 = vadd.f32 %v76, %v105
    %107 = vdwg.mxu0
    %v108 = vmax.f32 %v103, 0.0
    %v109 = vmax.f32 %v106, 0.0
    %v110 = vld [vmem:[#allocation7] sm:$0xff]
    %v111 = vld [vmem:[#allocation7 + $0x8] sm:$0xff]
    %v112 = vld [vmem:[#allocation7 + $0x10] sm:$0xff]
    %v113 = vld [vmem:[#allocation7 + $0x18] sm:$0xff]
    %v114 = vld [vmem:[#allocation7 + $0x20] sm:$0xff]
    %v115 = vld [vmem:[#allocation7 + $0x28] sm:$0xff]
    %v116 = vld [vmem:[#allocation7 + $0x30] sm:$0xff]
    %v117 = vld [vmem:[#allocation7 + $0x38] sm:$0xff]
    %v118 = vld [vmem:[#allocation7 + $0x40] sm:$0xff]
    %v119 = vld [vmem:[#allocation7 + $0x48] sm:$0xff]
    %v120 = vld [vmem:[#allocation7 + $0x50] sm:$0xff]
    %v121 = vld [vmem:[#allocation7 + $0x58] sm:$0xff]
    %v122 = vld [vmem:[#allocation7 + $0x60] sm:$0xff]
    %v123 = vld [vmem:[#allocation7 + $0x68] sm:$0xff]
    %v124 = vld [vmem:[#allocation7 + $0x70] sm:$0xff]
    %v125 = vld [vmem:[#allocation7 + $0x78] sm:$0xff]
    %v126 = vld [vmem:[%s4] sm:$0x1]
    %v128 = vperm.slane %v126, 0
    %130 = vmatpush.msra.mxu0 %v125
    %131 = vmatpush.msra.mxu0 %v124
    %132 = vmatpush.msra.mxu0 %v123
    %133 = vmatpush.msra.mxu0 %v122
    %134 = vmatpush.msra.mxu0 %v121
    %135 = vmatpush.msra.mxu0 %v120
    %136 = vmatpush.msra.mxu0 %v119
    %137 = vmatpush.msra.mxu0 %v118
    %138 = vmatpush.msra.mxu0 %v117
    %139 = vmatpush.msra.mxu0 %v116
    %140 = vmatpush.msra.mxu0 %v115
    %141 = vmatpush.msra.mxu0 %v114
    %142 = vmatpush.msra.mxu0 %v113
    %143 = vmatpush.msra.mxu0 %v112
    %144 = vmatpush.msra.mxu0 %v111
    %145 = vmatpush.msra.mxu0 %v110
    %146 = vmatmul.f32.gmra.mxu0 %v108
    %v147 = vpop.f32.mrf.mxu0
    %v148 = vadd.f32 %v128, %v147
    %149 = vmatmul.f32.gmra.mxu0 %v109
    %v150 = vpop.f32.mrf.mxu0
    %v151 = vadd.f32 %v128, %v150
    %152 = vdwg.mxu0
    %153 = vst [vmem:[#allocation8] sm:$0xff] %v148
    %154 = vst [vmem:[#allocation8 + $0x8] sm:$0xff] %v151
    // Predicated region
    $region34: #{tpu_custom_call.1} parent=1 // pred_check
      _
    $region35: #{tpu_custom_call.1} parent=1 // pred_check_branch
      %156 = sbr.rel (0) target = $region37
    $region36: #{tpu_custom_call.1} parent=1 // pred_region
      %158 = vsyncadd [#allocation4], 0
      %s159 = sshll.u32 [#allocation8], 4
      %s160 = int_to_ptr.vmem [resolvable:$true] %s159
      %s161 = sshll.u32 %s5, 4
      %s162 = int_to_ptr.hbm [resolvable:$true] %s161
      %167 = dma.vmem_to_hbm [thread:$0]  %s160, 256, %s162, [#allocation4], 128, 128, 8
    $region37: #{tpu_custom_call.1} parent=1 // pred_fallthru
      _
    // Predicated region
    $region38: #{tpu_custom_call.1} parent=1 // pred_check
      _
    $region39: #{tpu_custom_call.1} parent=1 // pred_check_branch
      %169 = sbr.rel (0) target = $region41
    $region40: #{tpu_custom_call.1} parent=1 // pred_region
      %171 = dma.done [#allocation4], 256
    $region41: #{tpu_custom_call.1} parent=1 // pred_fallthru
      _
    %172 = vsyncpa [#allocation3], 1
    %173 = vsyncpa [#allocation6], 1
    %174 = vsyncpa [#allocation4], 1

</llo_original>
